<compile_context>
chip_gen: v7x
topology: tpu7x:2x2x1
jax: 0.10.0
libtpu: 0.0.40
codegen_flags: <defaults>
</compile_context>

<pallas_src>
import math

import jax
import jax.numpy as jnp
from jax import lax
from jax.experimental import pallas as pl
from jax.experimental.pallas import tpu as pltpu

_MAX_BLOCK_ROWS = 512          # (512, 512) f32 = 1 MiB per input per buffer
_TWO_PI = 2.0 * math.pi
_INV_TWO_PI = 1.0 / _TWO_PI


# ---------------------------------------------------------------------------
# Kernel builder
# ---------------------------------------------------------------------------
def _make_sum_abs_kernel(mode, block_rows, n_rows, n_cols, n_blocks, group):
    """Kernel computing sum(|a-b|) (mode 0) or sum(|wrap(a-b)|) (mode 1)."""
    needs_mask = (n_rows % block_rows) != 0

    def _block_abs(a_ref, b_ref, block_idx):
        a = a_ref[...].astype(jnp.float32)
        b = b_ref[...].astype(jnp.float32)
        d = a - b
        if mode == 1:
            # atan2(sin(d), cos(d)) == wrap d into [-pi, pi); |.| identical.
            d = d - _TWO_PI * jnp.floor(d * _INV_TWO_PI + 0.5)
        y = jnp.abs(d)
        if needs_mask:
            row_ids = block_idx * block_rows + lax.broadcasted_iota(
                jnp.int32, (block_rows, 1), 0)
            y = jnp.where(row_ids < n_rows, y, 0.0)
        return y

    if n_blocks == 1:
        def kernel(a_ref, b_ref, o_ref):
            y = _block_abs(a_ref, b_ref, 0)
            o_ref[...] = jnp.full(o_ref.shape, jnp.sum(y), jnp.float32)

        return kernel, ()

    def kernel(a_ref, b_ref, o_ref, acc_ref):
        i = pl.program_id(0)

        @pl.when(i == 0)
        def _():
            acc_ref[...] = jnp.zeros_like(acc_ref)

        y = _block_abs(a_ref, b_ref, i)
        if group > 1:
            # Row-group partial reduce: pure VPU strided adds; keeps the
            # accumulator at (8, n_cols) instead of a full block.
            y = y.reshape(group, 8, n_cols).sum(axis=0)
        acc_ref[...] += y

        @pl.when(i == n_blocks - 1)
        def _():
            o_ref[...] = jnp.full(o_ref.shape, jnp.sum(acc_ref[...]),
                                  jnp.float32)

    return kernel, (pltpu.VMEM((8, n_cols), jnp.float32),)


# ---------------------------------------------------------------------------
# Per-item launch: sum of |a-b| (or wrapped) over all elements, f32 scalar.
# ---------------------------------------------------------------------------
def _sum_abs(a, b, mode, max_block_rows=_MAX_BLOCK_ROWS):
    max_block_rows = max(8, (int(max_block_rows) // 8) * 8)
    n = a.size
    a_flat = a.reshape(-1)                 # free for contiguous arrays
    b_flat = b.reshape(-1)

    n_cols = next((c for c in (512, 256, 128) if n % c == 0), None)
    if n_cols is None:
        # Odd-sized tensor: zero-pad just this item (zeros contribute 0).
        n_cols = 128
        pad = (-n) % n_cols
        a_flat = jnp.concatenate([a_flat, jnp.zeros((pad,), a_flat.dtype)])
        b_flat = jnp.concatenate([b_flat, jnp.zeros((pad,), b_flat.dtype)])

    n_rows = a_flat.size // n_cols
    a2 = a_flat.reshape(n_rows, n_cols)
    b2 = b_flat.reshape(n_rows, n_cols)

    if n_rows <= max_block_rows:
        block_rows, n_blocks, group = n_rows, 1, 1
    else:
        block_rows = max_block_rows        # multiple of 8 by construction
        n_blocks = pl.cdiv(n_rows, block_rows)
        group = block_rows // 8

    kernel, scratch = _make_sum_abs_kernel(mode, block_rows, n_rows, n_cols,
                                           n_blocks, group)

    out = pl.pallas_call(
        kernel,
        out_shape=jax.ShapeDtypeStruct((8, 128), jnp.float32),
        grid=(n_blocks,),
        in_specs=[
            pl.BlockSpec((block_rows, n_cols), lambda i: (i, 0)),
            pl.BlockSpec((block_rows, n_cols), lambda i: (i, 0)),
        ],
        out_specs=pl.BlockSpec((8, 128), lambda i: (0, 0)),
        scratch_shapes=list(scratch),
        compiler_params=pltpu.CompilerParams(
            dimension_semantics=("arbitrary",)),
    )(a2, b2)
    return out[0, 0]


# ---------------------------------------------------------------------------
# Total_loss forward
# ---------------------------------------------------------------------------
def total_loss(truth_coeff, pre_coeff, truth_img, pre_img, v=0.1,
               max_block_rows=_MAX_BLOCK_ROWS):
    """JAX/Pallas equivalent of Total_loss(v).forward(...)."""
    loss = _sum_abs(truth_img, pre_img, mode=0,
                    max_block_rows=max_block_rows) / truth_img.size
    for i in range(1, len(truth_coeff)):
        # TODO(synk): the strided [:, 4:, :, :] slice materializes an HBM copy;
        # supplying phase channels contiguously from the caller would remove it.
        t_ph = truth_coeff[i][:, 4:, :, :]
        p_ph = pre_coeff[i][:, 4:, :, :]
        if t_ph.size == 0:
            continue
        loss = loss + (float(v) / t_ph.size) * _sum_abs(
            t_ph, p_ph, mode=1, max_block_rows=max_block_rows)
    return loss


# Pure-JAX reference (follows the torch code literally) for a sanity check.
def _total_loss_ref(truth_coeff, pre_coeff, truth_img, pre_img, v=0.1):
    img_loss = jnp.mean(jnp.abs(truth_img - pre_img))
    phase_loss = 0.0
    for i in range(1, len(truth_coeff)):
        d = truth_coeff[i][:, 4:, :, :] - pre_coeff[i][:, 4:, :, :]
        wrapped = jnp.arctan2(jnp.sin(d), jnp.cos(d))
        phase_loss = phase_loss + jnp.mean(jnp.abs(wrapped))
    return v * phase_loss + img_loss


if __name__ == "__main__":
    key = jax.random.PRNGKey(0)
    ks = jax.random.split(key, 8)

    # NCHW-shaped synthetic inputs consistent with the module.
    truth_img = jax.random.normal(ks[0], (2, 3, 64, 64), jnp.float32)
    pre_img = jax.random.normal(ks[1], (2, 3, 64, 64), jnp.float32)

    # Steerable-pyramid-like coefficient lists; level 0 is skipped by the
    # loss, levels >= 1 have 8 channels (channels 4: are the phase channels).
    truth_coeff = [
        jax.random.normal(ks[2], (2, 6, 8, 8), jnp.float32),
        jax.random.normal(ks[3], (2, 8, 16, 16), jnp.float32) * 3.0,
        jax.random.normal(ks[4], (2, 8, 28, 28), jnp.float32) * 3.0,
    ]
    pre_coeff = [
        jax.random.normal(ks[5], (2, 6, 8, 8), jnp.float32),
        jax.random.normal(ks[6], (2, 8, 16, 16), jnp.float32) * 3.0,
        jax.random.normal(ks[7], (2, 8, 28, 28), jnp.float32) * 3.0,
    ]

    ref = _total_loss_ref(truth_coeff, pre_coeff, truth_img, pre_img, v=0.1)

    # Default tiling: every item fits a single block.
    loss = total_loss(truth_coeff, pre_coeff, truth_img, pre_img, v=0.1)
    loss = jax.block_until_ready(loss)
    assert jnp.allclose(loss, ref, atol=1e-4, rtol=1e-4), (loss, ref)

    # Small block override: exercises the tiled path (multi-block grid,
    # (8, C) accumulator, row-group reduce, masked tail block).
    loss_tiled = total_loss(truth_coeff, pre_coeff, truth_img, pre_img,
                            v=0.1, max_block_rows=16)
    loss_tiled = jax.block_until_ready(loss_tiled)
    assert jnp.allclose(loss_tiled, ref, atol=1e-4, rtol=1e-4), (loss_tiled, ref)

    print("KERNEL_OK")
</pallas_src>

<mosaic_0001>
module attributes {stable_mosaic.version = 11 : i64} {
  func.func @kernel(%arg0: i32, %arg1: memref<48x512xf32, #tpu.memory_space<vmem>>, %arg2: memref<48x512xf32, #tpu.memory_space<vmem>>, %arg3: memref<8x128xf32, #tpu.memory_space<vmem>>) attributes {dimension_semantics = [#tpu.dimension_semantics<arbitrary>], iteration_bounds = array<i64: 1>, scalar_prefetch = 0 : i64, scratch_operands = 0 : i64, tpu.core_type = #tpu.core_type<tc>, window_params = [{transform_indices = @transform_0, window_bounds = array<i64: 48, 512>}, {transform_indices = @transform_1, window_bounds = array<i64: 48, 512>}, {pipeline_mode = #tpu.pipeline_mode<synchronous>, transform_indices = @transform_2, window_bounds = array<i64: 8, 128>}]} {
    %c0 = arith.constant 0 : index
    %c0_0 = arith.constant 0 : index
    %0 = vector.load %arg1[%c0, %c0_0] : memref<48x512xf32, #tpu.memory_space<vmem>>, vector<48x512xf32>
    %c0_1 = arith.constant 0 : index
    %c0_2 = arith.constant 0 : index
    %1 = vector.load %arg2[%c0_1, %c0_2] : memref<48x512xf32, #tpu.memory_space<vmem>>, vector<48x512xf32>
    %2 = arith.subf %0, %1 : vector<48x512xf32>
    %3 = math.absf %2 : vector<48x512xf32>
    %4 = vector.shape_cast %3 : vector<48x512xf32> to vector<1x48x512xf32>
    %cst = arith.constant dense<0.000000e+00> : vector<1xf32>
    %5 = vector.multi_reduction <add>, %4, %cst [1, 2] : vector<1x48x512xf32> to vector<1xf32>
    %6 = vector.shape_cast %5 : vector<1xf32> to vector<1x1x1xf32>
    %7 = vector.extract %6[0, 0, 0] : f32 from vector<1x1x1xf32>
    %8 = vector.broadcast %7 : f32 to vector<8x128xf32>
    %c0_3 = arith.constant 0 : index
    %c0_4 = arith.constant 0 : index
    %9 = vector.load %arg3[%c0_3, %c0_4] : memref<8x128xf32, #tpu.memory_space<vmem>>, vector<8x128xf32>
    tpu.vector_store %arg3[%c0_3, %c0_4], %8 {strides = array<i32>} : memref<8x128xf32, #tpu.memory_space<vmem>>, vector<8x128xf32>,
    return
  }
  func.func @transform_0(%arg0: i32) -> (i32, i32) {
    %c0_i32 = arith.constant 0 : i32
    %c0_i32_0 = arith.constant 0 : i32
    return %arg0, %c0_i32 : i32, i32
  }
  func.func @transform_1(%arg0: i32) -> (i32, i32) {
    %c0_i32 = arith.constant 0 : i32
    %c0_i32_0 = arith.constant 0 : i32
    return %arg0, %c0_i32 : i32, i32
  }
  func.func @transform_2(%arg0: i32) -> (i32, i32) {
    %c0_i32 = arith.constant 0 : i32
    %c0_i32_0 = arith.constant 0 : i32
    %c0_i32_1 = arith.constant 0 : i32
    return %c0_i32, %c0_i32_0 : i32, i32
  }
}

</mosaic_0001>

<llo_original>
// kernel: tpu_custom_call.1
$region0: #{tpu_custom_call.1}
  #allocation0 [shape = 'u32[]', space=smem, size = 0x4, offset = 0x4, fixed_abs, tag = 'smem constant byte address 0x4 - core index']
  #allocation1 [shape = 'u32[144,128]{1,0:T(1,128)}', space=vmem, size = 0x12000, scoped, tag = 'internal scratch']
  %s0 = inlined_call_operand.hbm [shape: f32[48,512], index: 0, kind: input, shape index: {}]
  %s1 = inlined_call_operand.hbm [shape: f32[48,512], index: 1, kind: input, shape index: {}]
  %s2 = inlined_call_operand.hbm [shape: f32[8,128], index: 2, kind: output, shape index: {}]
  %s3 = sld [smem:[#allocation0]]
  $region26: #{tpu_custom_call.1} parent=0
    _
  %s5 = ssub.s32 1, %s3
  %s6 = scalar_select 0, %s5, %s3
  $region1: #{tpu_custom_call.1} parent=0
    #allocation2 [shape = 'u8[98304]{0}', space=vmem, size = 0x18000, scoped, tag = 'input window, operand 0, single buffered']
    #allocation3 [shape = 's32[1]{0}', space=sflag, size = 0x4, scoped, tag = 'scoped memory for tpu_custom_call.1']
    #allocation4 [shape = 's32[1]{0}', space=sflag, size = 0x4, scoped, tag = 'scoped memory for tpu_custom_call.1']
    #allocation5 [shape = 'u8[98304]{0}', space=vmem, size = 0x18000, scoped, tag = 'input window, operand 1, single buffered']
    #allocation6 [shape = 's32[1]{0}', space=sflag, size = 0x4, scoped, tag = 'scoped memory for tpu_custom_call.1']
    #allocation7 [shape = 'u8[4096]{0}', space=vmem, size = 0x1000, scoped, tag = 'output window, operand 0, single buffered']
    %7 = vsyncpa [#allocation3], 0
    %8 = vsyncpa [#allocation6], 0
    %9 = vsyncpa [#allocation4], 0
    // Predicated region
    $region2: #{tpu_custom_call.1} parent=1 // pred_check
      _
    $region3: #{tpu_custom_call.1} parent=1 // pred_check_branch
      %11 = sbr.rel (0) target = $region5
    $region4: #{tpu_custom_call.1} parent=1 // pred_region
      %s13 = ssub.s32 3072, 3072
      %14 = vsyncadd [#allocation3], %s13
      %s15 = sshll.u32 [#allocation2], 4
      %s16 = int_to_ptr.vmem [resolvable:$true] %s15
      %21 = dma.hbm_to_vmem [thread:$0]  %s0, 3072, %s16, [#allocation3], 512, 512, 32
    $region5: #{tpu_custom_call.1} parent=1 // pred_fallthru
      _
    // Predicated region
    $region6: #{tpu_custom_call.1} parent=1 // pred_check
      _
    $region7: #{tpu_custom_call.1} parent=1 // pred_check_branch
      %23 = sbr.rel (0) target = $region9
    $region8: #{tpu_custom_call.1} parent=1 // pred_region
      %s25 = ssub.s32 3072, 3072
      %26 = vsyncadd [#allocation6], %s25
      %s27 = sshll.u32 [#allocation5], 4
      %s28 = int_to_ptr.vmem [resolvable:$true] %s27
      %33 = dma.hbm_to_vmem [thread:$0]  %s1, 3072, %s28, [#allocation6], 512, 512, 32
    $region9: #{tpu_custom_call.1} parent=1 // pred_fallthru
      _
    // Predicated region
    $region10: #{tpu_custom_call.1} parent=1 // pred_check
      _
    $region11: #{tpu_custom_call.1} parent=1 // pred_check_branch
      %35 = sbr.rel (0) target = $region13
    $region12: #{tpu_custom_call.1} parent=1 // pred_region
      %36 = dma.done [#allocation3], 3072
    $region13: #{tpu_custom_call.1} parent=1 // pred_fallthru
      _
    // Predicated region
    $region14: #{tpu_custom_call.1} parent=1 // pred_check
      _
    $region15: #{tpu_custom_call.1} parent=1 // pred_check_branch
      %38 = sbr.rel (0) target = $region17
    $region16: #{tpu_custom_call.1} parent=1 // pred_region
      %39 = dma.done [#allocation6], 3072
    $region17: #{tpu_custom_call.1} parent=1 // pred_fallthru
      _
    %v40 = vld [vmem:[#allocation2] sm:$0xff]
    %v41 = vld [vmem:[#allocation2 + $0x8] sm:$0xff]
    %v42 = vld [vmem:[#allocation2 + $0x10] sm:$0xff]
    %v43 = vld [vmem:[#allocation2 + $0x18] sm:$0xff]
    %v44 = vld [vmem:[#allocation2 + $0x20] sm:$0xff]
    %v45 = vld [vmem:[#allocation2 + $0x28] sm:$0xff]
    %v46 = vld [vmem:[#allocation2 + $0x30] sm:$0xff]
    %v47 = vld [vmem:[#allocation2 + $0x38] sm:$0xff]
    %v48 = vld [vmem:[#allocation2 + $0x40] sm:$0xff]
    %v49 = vld [vmem:[#allocation2 + $0x48] sm:$0xff]
    %v50 = vld [vmem:[#allocation2 + $0x50] sm:$0xff]
    %v51 = vld [vmem:[#allocation2 + $0x58] sm:$0xff]
    %v52 = vld [vmem:[#allocation2 + $0x60] sm:$0xff]
    %v53 = vld [vmem:[#allocation2 + $0x68] sm:$0xff]
    %v54 = vld [vmem:[#allocation2 + $0x70] sm:$0xff]
    %v55 = vld [vmem:[#allocation2 + $0x78] sm:$0xff]
    %v56 = vld [vmem:[#allocation2 + $0x80] sm:$0xff]
    %v57 = vld [vmem:[#allocation2 + $0x88] sm:$0xff]
    %v58 = vld [vmem:[#allocation2 + $0x90] sm:$0xff]
    %v59 = vld [vmem:[#allocation2 + $0x98] sm:$0xff]
    %v60 = vld [vmem:[#allocation2 + $0xa0] sm:$0xff]
    %v61 = vld [vmem:[#allocation2 + $0xa8] sm:$0xff]
    %v62 = vld [vmem:[#allocation2 + $0xb0] sm:$0xff]
    %v63 = vld [vmem:[#allocation2 + $0xb8] sm:$0xff]
    %v64 = vld [vmem:[#allocation5] sm:$0xff]
    %v65 = vld [vmem:[#allocation5 + $0x8] sm:$0xff]
    %v66 = vld [vmem:[#allocation5 + $0x10] sm:$0xff]
    %v67 = vld [vmem:[#allocation5 + $0x18] sm:$0xff]
    %v68 = vld [vmem:[#allocation5 + $0x20] sm:$0xff]
    %v69 = vld [vmem:[#allocation5 + $0x28] sm:$0xff]
    %v70 = vld [vmem:[#allocation5 + $0x30] sm:$0xff]
    %v71 = vld [vmem:[#allocation5 + $0x38] sm:$0xff]
    %v72 = vld [vmem:[#allocation5 + $0x40] sm:$0xff]
    %v73 = vld [vmem:[#allocation5 + $0x48] sm:$0xff]
    %v74 = vld [vmem:[#allocation5 + $0x50] sm:$0xff]
    %v75 = vld [vmem:[#allocation5 + $0x58] sm:$0xff]
    %v76 = vld [vmem:[#allocation5 + $0x60] sm:$0xff]
    %v77 = vld [vmem:[#allocation5 + $0x68] sm:$0xff]
    %v78 = vld [vmem:[#allocation5 + $0x70] sm:$0xff]
    %v79 = vld [vmem:[#allocation5 + $0x78] sm:$0xff]
    %v80 = vld [vmem:[#allocation5 + $0x80] sm:$0xff]
    %v81 = vld [vmem:[#allocation5 + $0x88] sm:$0xff]
    %v82 = vld [vmem:[#allocation5 + $0x90] sm:$0xff]
    %v83 = vld [vmem:[#allocation5 + $0x98] sm:$0xff]
    %v84 = vld [vmem:[#allocation5 + $0xa0] sm:$0xff]
    %v85 = vld [vmem:[#allocation5 + $0xa8] sm:$0xff]
    %v86 = vld [vmem:[#allocation5 + $0xb0] sm:$0xff]
    %v87 = vld [vmem:[#allocation5 + $0xb8] sm:$0xff]
    %v88 = vsub.f32 %v40, %v64
    %v89 = vsub.f32 %v41, %v65
    %v90 = vsub.f32 %v42, %v66
    %v91 = vsub.f32 %v43, %v67
    %v92 = vsub.f32 %v44, %v68
    %v93 = vsub.f32 %v45, %v69
    %v94 = vsub.f32 %v46, %v70
    %v95 = vsub.f32 %v47, %v71
    %v96 = vsub.f32 %v48, %v72
    %v97 = vsub.f32 %v49, %v73
    %v98 = vsub.f32 %v50, %v74
    %v99 = vsub.f32 %v51, %v75
    %v100 = vsub.f32 %v52, %v76
    %v101 = vsub.f32 %v53, %v77
    %v102 = vsub.f32 %v54, %v78
    %v103 = vsub.f32 %v55, %v79
    %v104 = vsub.f32 %v56, %v80
    %v105 = vsub.f32 %v57, %v81
    %v106 = vsub.f32 %v58, %v82
    %v107 = vsub.f32 %v59, %v83
    %v108 = vsub.f32 %v60, %v84
    %v109 = vsub.f32 %v61, %v85
    %v110 = vsub.f32 %v62, %v86
    %v111 = vsub.f32 %v63, %v87
    %v112 = vand.u32 2147483647, %v88
    %v113 = vand.u32 2147483647, %v89
    %v114 = vand.u32 2147483647, %v90
    %v115 = vand.u32 2147483647, %v91
    %v116 = vand.u32 2147483647, %v92
    %v117 = vand.u32 2147483647, %v93
    %v118 = vand.u32 2147483647, %v94
    %v119 = vand.u32 2147483647, %v95
    %v120 = vand.u32 2147483647, %v96
    %v121 = vand.u32 2147483647, %v97
    %v122 = vand.u32 2147483647, %v98
    %v123 = vand.u32 2147483647, %v99
    %v124 = vand.u32 2147483647, %v100
    %v125 = vand.u32 2147483647, %v101
    %v126 = vand.u32 2147483647, %v102
    %v127 = vand.u32 2147483647, %v103
    %v128 = vand.u32 2147483647, %v104
    %v129 = vand.u32 2147483647, %v105
    %v130 = vand.u32 2147483647, %v106
    %v131 = vand.u32 2147483647, %v107
    %v132 = vand.u32 2147483647, %v108
    %v133 = vand.u32 2147483647, %v109
    %v134 = vand.u32 2147483647, %v110
    %v135 = vand.u32 2147483647, %v111
    %v136 = vadd.f32 %v112, %v113
    %v137 = vadd.f32 %v136, %v114
    %v138 = vadd.f32 %v137, %v115
    %v139 = vadd.f32 %v138, %v116
    %v140 = vadd.f32 %v139, %v117
    %v141 = vadd.f32 %v140, %v118
    %v142 = vadd.f32 %v141, %v119
    %v143 = vadd.f32 %v142, %v120
    %v144 = vadd.f32 %v143, %v121
    %v145 = vadd.f32 %v144, %v122
    %v146 = vadd.f32 %v145, %v123
    %v147 = vadd.f32 %v146, %v124
    %v148 = vadd.f32 %v147, %v125
    %v149 = vadd.f32 %v148, %v126
    %v150 = vadd.f32 %v149, %v127
    %v151 = vadd.f32 %v150, %v128
    %v152 = vadd.f32 %v151, %v129
    %v153 = vadd.f32 %v152, %v130
    %v154 = vadd.f32 %v153, %v131
    %v155 = vadd.f32 %v154, %v132
    %v156 = vadd.f32 %v155, %v133
    %v157 = vadd.f32 %v156, %v134
    %v158 = vadd.f32 %v157, %v135
    %159 = vadd.xlane.f32.xlu0 %v158
    %v160 = vpop.xlane.xlu0 %159
    %v161 = vrot.slane %v160, 4
    %v162 = vadd.f32 %v160, %v161
    %v163 = vrot.slane %v162, 2
    %v164 = vadd.f32 %v162, %v163
    %v165 = vrot.slane %v164, 1
    %v166 = vadd.f32 %v164, %v165
    %s167 = vtos %v166
    %v168 = vstv %s167
    %169 = vst [vmem:[#allocation7] sm:$0xff] %v168
    // Predicated region
    $region18: #{tpu_custom_call.1} parent=1 // pred_check
      _
    $region19: #{tpu_custom_call.1} parent=1 // pred_check_branch
      %171 = sbr.rel (0) target = $region21
    $region20: #{tpu_custom_call.1} parent=1 // pred_region
      %s173 = ssub.s32 128, 128
      %174 = vsyncadd [#allocation4], %s173
      %s176 = sshll.u32 [#allocation7], 4
      %s177 = int_to_ptr.vmem [resolvable:$true] %s176
      %179 = dma.vmem_to_hbm [thread:$0]  %s177, 128, %s2, [#allocation4]
    $region21: #{tpu_custom_call.1} parent=1 // pred_fallthru
      _
    // Predicated region
    $region22: #{tpu_custom_call.1} parent=1 // pred_check
      _
    $region23: #{tpu_custom_call.1} parent=1 // pred_check_branch
      %181 = sbr.rel (0) target = $region25
    $region24: #{tpu_custom_call.1} parent=1 // pred_region
      %182 = dma.done [#allocation4], 128
    $region25: #{tpu_custom_call.1} parent=1 // pred_fallthru
      _
    %183 = vsyncpa [#allocation3], 1
    %184 = vsyncpa [#allocation6], 1
    %185 = vsyncpa [#allocation4], 1

</llo_original>
